<compile_context>
chip_gen: v7x
topology: tpu7x:2x2x1
jax: 0.10.0
libtpu: 0.0.40
codegen_flags: <defaults>
</compile_context>

<pallas_src>
import jax
import jax.numpy as jnp
from jax.experimental import pallas as pl
from jax.experimental.pallas import tpu as pltpu


def _axial_rope_kernel(xsin_ref, xcos_ref, ysin_ref, ycos_ref, sin_ref, cos_ref):
    # xsin_ref / xcos_ref : (block_rows, rep_w) row-dependent x-half tables
    #                       (sin/cos(i*inv_freq) in x columns, 0 in y columns)
    # ysin_ref / ycos_ref : (1, wfull) row-invariant y-half tables
    #                       (sin/cos(j*inv_freq) in y columns, 0 in x columns)
    # sin_ref / cos_ref   : (block_rows, wfull) lane-dense output blocks
    wfull = sin_ref.shape[-1]
    rep_w = xsin_ref.shape[-1]
    n_rep = wfull // rep_w                    # small static count (<= 16)

    xs = xsin_ref[...]                        # hoisted: reused for every replica
    xc = xcos_ref[...]
    for k in range(n_rep):                    # unrolled replicate + add + store
        lo, hi = k * rep_w, (k + 1) * rep_w   # static, lane-aligned offsets
        sin_ref[:, lo:hi] = xs + ysin_ref[:, lo:hi]
        cos_ref[:, lo:hi] = xc + ycos_ref[:, lo:hi]


def _vmem_budget():
    """(cap bytes per output block, vmem_limit_bytes) — generation aware."""
    try:
        vmem_phys = int(getattr(pltpu.get_tpu_info(), "vmem_capacity_bytes", 0))
    except Exception:
        vmem_phys = 0
    if vmem_phys >= 100 * (1 << 20):          # v5e / v6e class: 128 MiB VMEM
        return 8 << 20, 64 << 20
    return 4 << 20, 32 << 20                  # v7x (64 MiB) or unknown: conservative


def _pick_block_rows(n_rows: int, row_bytes: int, cap_bytes: int) -> int:
    """Row-block size: multiple of 8, under the per-output VMEM cap, and small
    enough that the grid has >= 2 steps whenever n_rows > 8 (v7x megacore)."""
    cap_rows = max(8, (cap_bytes // max(row_bytes, 1)) // 8 * 8)
    if n_rows <= 8:
        return 8
    half_rows = max(8, (n_rows // 2) // 8 * 8)
    return min(cap_rows, half_rows)


def _pick_rep_width(n: int, out_dim: int, max_rep: int = 16) -> int:
    """Smallest lane-aligned replication window: c*out_dim with c | n,
    (c*out_dim) % 128 == 0 and replication count n/c <= max_rep (bounds the
    unrolled store loop).  Fallback: full width (no dedup)."""
    for c in range(1, n + 1):
        if n % c == 0 and (c * out_dim) % 128 == 0 and (n // c) <= max_rep:
            return c * out_dim
    return n * out_dim


def axial_rotary_embedding(n: int, dim: int, max_freq: int = 10):
    """Returns (sin, cos), each (1, n*n, 4*len(inv_freq)) float32."""
    d_half = dim // 2
    inv_freq = 1.0 / (10000.0 ** (jnp.arange(0, d_half, 2, dtype=jnp.float32) / d_half))
    f = int(inv_freq.shape[0])
    out_dim = 4 * f                      # == dim iff dim % 4 == 0
    wfull = n * out_dim

    # --- block / grid sizing -------------------------------------------------
    cap_bytes, vmem_limit = _vmem_budget()
    row_bytes = wfull * 4
    block_rows = _pick_block_rows(n, row_bytes, cap_bytes)
    n_pad = int(pl.cdiv(n, block_rows)) * block_rows       # padded row count
    grid = (n_pad // block_rows,)

    rep_w = _pick_rep_width(n, out_dim)
    n_rep = wfull // rep_w

    # --- tiny host-side lookup tables (glue; O(n*rep_w) vs O(n^2) output) ----
    # x-half tables: column pattern has period out_dim; x columns (m < f) hold
    # sin/cos(i * inv_freq[m]), y columns hold 0.  Padded rows (i >= n) are
    # harmless and sliced off below.
    lane_x = jnp.arange(rep_w)
    m_x = (lane_x % out_dim) // 2
    is_x = m_x < f
    xfreq = jnp.where(is_x, inv_freq[m_x % f], 0.0).astype(jnp.float32)   # (rep_w,)
    rows = jnp.arange(n_pad, dtype=jnp.float32)[:, None]                  # (n_pad, 1)
    x_ang = rows * xfreq[None, :]
    xsin = jnp.where(is_x[None, :], jnp.sin(x_ang), 0.0).astype(jnp.float32)
    xcos = jnp.where(is_x[None, :], jnp.cos(x_ang), 0.0).astype(jnp.float32)

    # y-half tables: row-invariant over the full slab width; y columns hold
    # sin/cos(j * inv_freq[m-f]), x columns hold 0.
    lane = jnp.arange(wfull)
    jidx = (lane // out_dim).astype(jnp.float32)
    m_y = (lane % out_dim) // 2
    is_y = m_y >= f
    y_ang = jidx * inv_freq[jnp.where(is_y, m_y - f, 0)]
    ysin = jnp.where(is_y, jnp.sin(y_ang), 0.0).astype(jnp.float32)[None, :]
    ycos = jnp.where(is_y, jnp.cos(y_ang), 0.0).astype(jnp.float32)[None, :]

    # --- kernel launch: lane-dense (n_pad, n*out_dim) slabs ------------------
    sin_slab, cos_slab = pl.pallas_call(
        _axial_rope_kernel,
        out_shape=[
            jax.ShapeDtypeStruct((n_pad, wfull), jnp.float32),
            jax.ShapeDtypeStruct((n_pad, wfull), jnp.float32),
        ],
        grid=grid,
        in_specs=[
            pl.BlockSpec((block_rows, rep_w), lambda r: (r, 0)),   # xsin
            pl.BlockSpec((block_rows, rep_w), lambda r: (r, 0)),   # xcos
            pl.BlockSpec((1, wfull), lambda r: (0, 0)),            # ysin
            pl.BlockSpec((1, wfull), lambda r: (0, 0)),            # ycos
        ],
        out_specs=[
            pl.BlockSpec((block_rows, wfull), lambda r: (r, 0)),
            pl.BlockSpec((block_rows, wfull), lambda r: (r, 0)),
        ],
        compiler_params=pltpu.CompilerParams(
            dimension_semantics=("parallel",),
            vmem_limit_bytes=vmem_limit,
        ),
    )(xsin, xcos, ysin, ycos)

    # (n, n*out_dim) row-major == (n, n, out_dim) row-major: free reshape;
    # the [:n] slice drops the padded rows.
    sin = sin_slab[:n].reshape(1, n * n, out_dim)
    cos = cos_slab[:n].reshape(1, n * n, out_dim)
    del n_rep  # (documented above; kept static inside the kernel)
    return sin, cos


def _reference(n: int, dim: int):
    """Pure-JAX reimplementation of the PyTorch forward for verification."""
    d_half = dim // 2
    inv_freq = 1.0 / (10000.0 ** (jnp.arange(0, d_half, 2, dtype=jnp.float32) / d_half))
    seq = jnp.arange(n, dtype=jnp.float32)
    x = seq[:, None] * inv_freq[None, :]                              # (n, f)
    x_sinu = jnp.broadcast_to(x[:, None, :], (n, n, x.shape[-1]))     # i d -> i j d
    y_sinu = jnp.broadcast_to(x[None, :, :], (n, n, x.shape[-1]))     # j d -> i j d
    sin = jnp.concatenate([jnp.sin(x_sinu), jnp.sin(y_sinu)], axis=-1)
    cos = jnp.concatenate([jnp.cos(x_sinu), jnp.cos(y_sinu)], axis=-1)

    def rep(t):  # 'i j d -> () (i j) (d r)', r=2
        t = jnp.repeat(t, 2, axis=-1)
        return t.reshape(1, n * n, -1)

    return rep(sin), rep(cos)


if __name__ == "__main__":
    # The module's forward takes no tensor inputs (just n); key kept for
    # determinism-protocol consistency.
    _ = jax.random.PRNGKey(0)

    # (n, dim) cases: default-ish small, non-multiple-of-8 n (ragged/pad path),
    # and a larger n exercising the lane-replication + multi-step grid path.
    for n, dim in [(16, 32), (37, 32), (64, 32)]:
        sin, cos = axial_rotary_embedding(n, dim)
        sin = jax.block_until_ready(sin)
        cos = jax.block_until_ready(cos)

        sin_ref, cos_ref = _reference(n, dim)
        assert sin.shape == sin_ref.shape, (sin.shape, sin_ref.shape)
        assert cos.shape == cos_ref.shape, (cos.shape, cos_ref.shape)
        assert jnp.allclose(sin, sin_ref, atol=1e-5, rtol=1e-5), f"sin mismatch n={n}"
        assert jnp.allclose(cos, cos_ref, atol=1e-5, rtol=1e-5), f"cos mismatch n={n}"

    print("KERNEL_OK")
</pallas_src>

<mosaic_0001>
module attributes {stable_mosaic.version = 11 : i64} {
  func.func @_axial_rope_kernel(%arg0: i32, %arg1: memref<8x128xf32, #tpu.memory_space<vmem>>, %arg2: memref<8x128xf32, #tpu.memory_space<vmem>>, %arg3: memref<1x512xf32, #tpu.memory_space<vmem>>, %arg4: memref<1x512xf32, #tpu.memory_space<vmem>>, %arg5: memref<8x512xf32, #tpu.memory_space<vmem>>, %arg6: memref<8x512xf32, #tpu.memory_space<vmem>>) attributes {dimension_semantics = [#tpu.dimension_semantics<parallel>], iteration_bounds = array<i64: 2>, scalar_prefetch = 0 : i64, scratch_operands = 0 : i64, tpu.core_type = #tpu.core_type<tc>, window_params = [{transform_indices = @transform_0, window_bounds = array<i64: 8, 128>}, {transform_indices = @transform_1, window_bounds = array<i64: 8, 128>}, {pipeline_mode = #tpu.pipeline_mode<synchronous>, transform_indices = @transform_2, window_bounds = array<i64: 1, 512>}, {pipeline_mode = #tpu.pipeline_mode<synchronous>, transform_indices = @transform_3, window_bounds = array<i64: 1, 512>}, {transform_indices = @transform_4, window_bounds = array<i64: 8, 512>}, {transform_indices = @transform_5, window_bounds = array<i64: 8, 512>}]} {
    %c0 = arith.constant 0 : index
    %c0_0 = arith.constant 0 : index
    %0 = vector.load %arg1[%c0, %c0_0] : memref<8x128xf32, #tpu.memory_space<vmem>>, vector<8x128xf32>
    %c0_1 = arith.constant 0 : index
    %c0_2 = arith.constant 0 : index
    %1 = vector.load %arg2[%c0_1, %c0_2] : memref<8x128xf32, #tpu.memory_space<vmem>>, vector<8x128xf32>
    %c0_3 = arith.constant 0 : index
    %c0_4 = arith.constant 0 : index
    %2 = vector.load %arg3[%c0_3, %c0_4] : memref<1x512xf32, #tpu.memory_space<vmem>>, vector<1x128xf32>
    %3 = vector.broadcast %2 : vector<1x128xf32> to vector<8x128xf32>
    %4 = arith.addf %0, %3 : vector<8x128xf32>
    %c0_5 = arith.constant 0 : index
    %c0_6 = arith.constant 0 : index
    %5 = vector.load %arg5[%c0_5, %c0_6] : memref<8x512xf32, #tpu.memory_space<vmem>>, vector<8x128xf32>
    tpu.vector_store %arg5[%c0_5, %c0_6], %4 {strides = array<i32>} : memref<8x512xf32, #tpu.memory_space<vmem>>, vector<8x128xf32>,
    %c0_7 = arith.constant 0 : index
    %c0_8 = arith.constant 0 : index
    %6 = vector.load %arg4[%c0_7, %c0_8] : memref<1x512xf32, #tpu.memory_space<vmem>>, vector<1x128xf32>
    %7 = vector.broadcast %6 : vector<1x128xf32> to vector<8x128xf32>
    %8 = arith.addf %1, %7 : vector<8x128xf32>
    %c0_9 = arith.constant 0 : index
    %c0_10 = arith.constant 0 : index
    %9 = vector.load %arg6[%c0_9, %c0_10] : memref<8x512xf32, #tpu.memory_space<vmem>>, vector<8x128xf32>
    tpu.vector_store %arg6[%c0_9, %c0_10], %8 {strides = array<i32>} : memref<8x512xf32, #tpu.memory_space<vmem>>, vector<8x128xf32>,
    %c0_11 = arith.constant 0 : index
    %c128 = arith.constant 128 : index
    %10 = vector.load %arg3[%c0_11, %c128] : memref<1x512xf32, #tpu.memory_space<vmem>>, vector<1x128xf32>
    %11 = vector.broadcast %10 : vector<1x128xf32> to vector<8x128xf32>
    %12 = arith.addf %0, %11 : vector<8x128xf32>
    %c0_12 = arith.constant 0 : index
    %c128_13 = arith.constant 128 : index
    %13 = vector.load %arg5[%c0_12, %c128_13] : memref<8x512xf32, #tpu.memory_space<vmem>>, vector<8x128xf32>
    tpu.vector_store %arg5[%c0_12, %c128_13], %12 {strides = array<i32>} : memref<8x512xf32, #tpu.memory_space<vmem>>, vector<8x128xf32>,
    %c0_14 = arith.constant 0 : index
    %c128_15 = arith.constant 128 : index
    %14 = vector.load %arg4[%c0_14, %c128_15] : memref<1x512xf32, #tpu.memory_space<vmem>>, vector<1x128xf32>
    %15 = vector.broadcast %14 : vector<1x128xf32> to vector<8x128xf32>
    %16 = arith.addf %1, %15 : vector<8x128xf32>
    %c0_16 = arith.constant 0 : index
    %c128_17 = arith.constant 128 : index
    %17 = vector.load %arg6[%c0_16, %c128_17] : memref<8x512xf32, #tpu.memory_space<vmem>>, vector<8x128xf32>
    tpu.vector_store %arg6[%c0_16, %c128_17], %16 {strides = array<i32>} : memref<8x512xf32, #tpu.memory_space<vmem>>, vector<8x128xf32>,
    %c0_18 = arith.constant 0 : index
    %c256 = arith.constant 256 : index
    %18 = vector.load %arg3[%c0_18, %c256] : memref<1x512xf32, #tpu.memory_space<vmem>>, vector<1x128xf32>
    %19 = vector.broadcast %18 : vector<1x128xf32> to vector<8x128xf32>
    %20 = arith.addf %0, %19 : vector<8x128xf32>
    %c0_19 = arith.constant 0 : index
    %c256_20 = arith.constant 256 : index
    %21 = vector.load %arg5[%c0_19, %c256_20] : memref<8x512xf32, #tpu.memory_space<vmem>>, vector<8x128xf32>
    tpu.vector_store %arg5[%c0_19, %c256_20], %20 {strides = array<i32>} : memref<8x512xf32, #tpu.memory_space<vmem>>, vector<8x128xf32>,
    %c0_21 = arith.constant 0 : index
    %c256_22 = arith.constant 256 : index
    %22 = vector.load %arg4[%c0_21, %c256_22] : memref<1x512xf32, #tpu.memory_space<vmem>>, vector<1x128xf32>
    %23 = vector.broadcast %22 : vector<1x128xf32> to vector<8x128xf32>
    %24 = arith.addf %1, %23 : vector<8x128xf32>
    %c0_23 = arith.constant 0 : index
    %c256_24 = arith.constant 256 : index
    %25 = vector.load %arg6[%c0_23, %c256_24] : memref<8x512xf32, #tpu.memory_space<vmem>>, vector<8x128xf32>
    tpu.vector_store %arg6[%c0_23, %c256_24], %24 {strides = array<i32>} : memref<8x512xf32, #tpu.memory_space<vmem>>, vector<8x128xf32>,
    %c0_25 = arith.constant 0 : index
    %c384 = arith.constant 384 : index
    %26 = vector.load %arg3[%c0_25, %c384] : memref<1x512xf32, #tpu.memory_space<vmem>>, vector<1x128xf32>
    %27 = vector.broadcast %26 : vector<1x128xf32> to vector<8x128xf32>
    %28 = arith.addf %0, %27 : vector<8x128xf32>
    %c0_26 = arith.constant 0 : index
    %c384_27 = arith.constant 384 : index
    %29 = vector.load %arg5[%c0_26, %c384_27] : memref<8x512xf32, #tpu.memory_space<vmem>>, vector<8x128xf32>
    tpu.vector_store %arg5[%c0_26, %c384_27], %28 {strides = array<i32>} : memref<8x512xf32, #tpu.memory_space<vmem>>, vector<8x128xf32>,
    %c0_28 = arith.constant 0 : index
    %c384_29 = arith.constant 384 : index
    %30 = vector.load %arg4[%c0_28, %c384_29] : memref<1x512xf32, #tpu.memory_space<vmem>>, vector<1x128xf32>
    %31 = vector.broadcast %30 : vector<1x128xf32> to vector<8x128xf32>
    %32 = arith.addf %1, %31 : vector<8x128xf32>
    %c0_30 = arith.constant 0 : index
    %c384_31 = arith.constant 384 : index
    %33 = vector.load %arg6[%c0_30, %c384_31] : memref<8x512xf32, #tpu.memory_space<vmem>>, vector<8x128xf32>
    tpu.vector_store %arg6[%c0_30, %c384_31], %32 {strides = array<i32>} : memref<8x512xf32, #tpu.memory_space<vmem>>, vector<8x128xf32>,
    return
  }
  func.func @transform_0(%arg0: i32) -> (i32, i32) {
    %c0_i32 = arith.constant 0 : i32
    %c0_i32_0 = arith.constant 0 : i32
    return %arg0, %c0_i32 : i32, i32
  }
  func.func @transform_1(%arg0: i32) -> (i32, i32) {
    %c0_i32 = arith.constant 0 : i32
    %c0_i32_0 = arith.constant 0 : i32
    return %arg0, %c0_i32 : i32, i32
  }
  func.func @transform_2(%arg0: i32) -> (i32, i32) {
    %c0_i32 = arith.constant 0 : i32
    %c0_i32_0 = arith.constant 0 : i32
    %c0_i32_1 = arith.constant 0 : i32
    return %c0_i32, %c0_i32_0 : i32, i32
  }
  func.func @transform_3(%arg0: i32) -> (i32, i32) {
    %c0_i32 = arith.constant 0 : i32
    %c0_i32_0 = arith.constant 0 : i32
    %c0_i32_1 = arith.constant 0 : i32
    return %c0_i32, %c0_i32_0 : i32, i32
  }
  func.func @transform_4(%arg0: i32) -> (i32, i32) {
    %c0_i32 = arith.constant 0 : i32
    %c0_i32_0 = arith.constant 0 : i32
    return %arg0, %c0_i32 : i32, i32
  }
  func.func @transform_5(%arg0: i32) -> (i32, i32) {
    %c0_i32 = arith.constant 0 : i32
    %c0_i32_0 = arith.constant 0 : i32
    return %arg0, %c0_i32 : i32, i32
  }
}

</mosaic_0001>

<llo_original>
// kernel: tpu_custom_call.1
$region0: #{tpu_custom_call.1}
  #allocation0 [shape = 'u32[]', space=smem, size = 0x4, offset = 0x4, fixed_abs, tag = 'smem constant byte address 0x4 - core index']
  #allocation1 [shape = 'u32[144,128]{1,0:T(1,128)}', space=vmem, size = 0x12000, scoped, tag = 'internal scratch']
  %s0 = inlined_call_operand.hbm [shape: f32[16,128], index: 0, kind: input, shape index: {}]
  %s1 = inlined_call_operand.hbm [shape: f32[16,128], index: 1, kind: input, shape index: {}]
  %s2 = inlined_call_operand.vmem [shape: f32[1,512], index: 2, kind: input, shape index: {}]
  %s3 = inlined_call_operand.vmem [shape: f32[1,512], index: 3, kind: input, shape index: {}]
  %s4 = inlined_call_operand.hbm [shape: f32[16,512], index: 4, kind: output, shape index: {0}]
  %s5 = inlined_call_operand.hbm [shape: f32[16,512], index: 5, kind: output, shape index: {1}]
  %6 = xla_tuple %s4, %s5
  %s7 = sld [smem:[#allocation0]]
  $region65: #{tpu_custom_call.1} parent=0
    _
  %s9 = ssub.s32 1, %s7
  %s10 = scalar_select 0, %s9, %s7
  $region1: #{tpu_custom_call.1} parent=0
    #allocation2 [shape = 'u8[8192]{0}', space=vmem, size = 0x2000, scoped, tag = 'input window, operand 0']
    #allocation3 [shape = 's32[2]{0}', space=sflag, size = 0x8, scoped, tag = 'scoped memory for tpu_custom_call.1']
    #allocation4 [shape = 's32[2]{0}', space=sflag, size = 0x8, scoped, tag = 'scoped memory for tpu_custom_call.1']
    #allocation5 [shape = 'u8[8192]{0}', space=vmem, size = 0x2000, scoped, tag = 'input window, operand 1']
    #allocation6 [shape = 's32[2]{0}', space=sflag, size = 0x8, scoped, tag = 'scoped memory for tpu_custom_call.1']
    #allocation7 [shape = 'u8[32768]{0}', space=vmem, size = 0x8000, scoped, tag = 'output window, operand 0']
    #allocation8 [shape = 'u8[32768]{0}', space=vmem, size = 0x8000, scoped, tag = 'output window, operand 1']
    #allocation9 [shape = 's32[2]{0}', space=sflag, size = 0x8, scoped, tag = 'scoped memory for tpu_custom_call.1']
    %11 = vsyncpa [#allocation3], 0
    %s12 = scalar_lea.sflag [#allocation3], 1
    %13 = vsyncpa %s12, 0
    %14 = vsyncpa [#allocation6], 0
    %s15 = scalar_lea.sflag [#allocation6], 1
    %16 = vsyncpa %s15, 0
    %17 = vsyncpa [#allocation4], 0
    %s18 = scalar_lea.sflag [#allocation4], 1
    %19 = vsyncpa %s18, 0
    %20 = vsyncpa [#allocation9], 0
    %s21 = scalar_lea.sflag [#allocation9], 1
    %22 = vsyncpa %s21, 0
    loop: start=0, step=1, limit=4
    $region2: #{tpu_custom_call.1} parent=1 // loop_pre_header
      _
    $region3: #{tpu_custom_call.1} parent=1 // loop_header
      %s24 = sphi 0, %s28
      %p25 = scmp.ge.s32.totalorder %s24, 4
      %s34 = sphi 0, %s36
      %s37 = sphi 0, %s34
      %s38 = sphi 0, %s37
      %s54 = sphi 0, %s38
      %s60 = sphi 0, %s62
      %s63 = sphi 0, %s60
      %s64 = sphi 0, %s63
      %s80 = sphi 0, %s64
      %s84 = sphi 0, %s84
      %s86 = sphi 0, %s84
      %s87 = sphi 0, %s86
      %s101 = sphi 0, %s87
      %s105 = sphi 0, %s105
      %s107 = sphi 0, %s105
      %s108 = sphi 0, %s107
      %s122 = sphi 0, %s108
      %s128 = sphi 0, %s130
      %s131 = sphi 0, %s128
      %s132 = sphi 0, %s131
      %s148 = sphi 0, %s132
      %s154 = sphi 0, %s156
      %s157 = sphi 0, %s154
      %s158 = sphi 0, %s157
      %s174 = sphi 0, %s158
    $region4: #{tpu_custom_call.1} parent=1 // loop_header_branch
      %27 = sbr.rel (%p25) target = $region8
    $region5: #{tpu_custom_call.1} parent=1 // loop_body
      %s29 = ssub.s32 %s24, 1
      %s30 = ssub.s32 %s24, 2
      %s31 = sadd.s32 %s24, 1
      %s32 = ssub.s32 %s24, %s31
      %p33 = scmp.eq.s32.totalorder %s32, 0
      %s35 = sadd.s32 %s34, 1
      %s36 = scalar_select %p33, %s34, %s35
      %p39 = pneg %p33
      %p40 = scmp.eq.s32.totalorder %s24, 1
      %p41 = por %p39, %p40
      %p42 = scmp.ne.s32.totalorder %s34, %s37
      %p43 = scmp.eq.s32.totalorder %s24, 0
      %p44 = por %p42, %p43
      %p45 = scmp.ne.s32.totalorder %s34, %s37
      %p46 = scmp.eq.s32.totalorder %s29, 1
      %p47 = por %p45, %p46
      %p48 = scmp.ne.s32.totalorder %s37, %s38
      %p49 = scmp.eq.s32.totalorder %s29, 0
      %p50 = por %p48, %p49
      %p51 = scmp.ne.s32.totalorder %s37, %s38
      %p52 = scmp.eq.s32.totalorder %s30, 1
      %p53 = por %p51, %p52
      %p55 = scmp.ne.s32.totalorder %s38, %s54
      %p56 = scmp.eq.s32.totalorder %s30, 0
      %p57 = por %p55, %p56
      %s58 = ssub.s32 %s24, %s31
      %p59 = scmp.eq.s32.totalorder %s58, 0
      %s61 = sadd.s32 %s60, 1
      %s62 = scalar_select %p59, %s60, %s61
      %p65 = pneg %p59
      %p66 = scmp.eq.s32.totalorder %s24, 1
      %p67 = por %p65, %p66
      %p68 = scmp.ne.s32.totalorder %s60, %s63
      %p69 = scmp.eq.s32.totalorder %s24, 0
      %p70 = por %p68, %p69
      %p71 = scmp.ne.s32.totalorder %s60, %s63
      %p72 = scmp.eq.s32.totalorder %s29, 1
      %p73 = por %p71, %p72
      %p74 = scmp.ne.s32.totalorder %s63, %s64
      %p75 = scmp.eq.s32.totalorder %s29, 0
      %p76 = por %p74, %p75
      %p77 = scmp.ne.s32.totalorder %s63, %s64
      %p78 = scmp.eq.s32.totalorder %s30, 1
      %p79 = por %p77, %p78
      %p81 = scmp.ne.s32.totalorder %s64, %s80
      %p82 = scmp.eq.s32.totalorder %s30, 0
      %p83 = por %p81, %p82
      %s85 = sadd.s32 %s84, 1
      %p88 = scmp.eq.s32.totalorder %s24, 1
      %p89 = scmp.ne.s32.totalorder %s84, %s86
      %p90 = scmp.eq.s32.totalorder %s24, 0
      %p91 = por %p89, %p90
      %p92 = scmp.ne.s32.totalorder %s84, %s86
      %p93 = scmp.eq.s32.totalorder %s29, 1
      %p94 = por %p92, %p93
      %p95 = scmp.ne.s32.totalorder %s86, %s87
      %p96 = scmp.eq.s32.totalorder %s29, 0
      %p97 = por %p95, %p96
      %p98 = scmp.ne.s32.totalorder %s86, %s87
      %p99 = scmp.eq.s32.totalorder %s30, 1
      %p100 = por %p98, %p99
      %p102 = scmp.ne.s32.totalorder %s87, %s101
      %p103 = scmp.eq.s32.totalorder %s30, 0
      %p104 = por %p102, %p103
      %s106 = sadd.s32 %s105, 1
      %p109 = scmp.eq.s32.totalorder %s24, 1
      %p110 = scmp.ne.s32.totalorder %s105, %s107
      %p111 = scmp.eq.s32.totalorder %s24, 0
      %p112 = por %p110, %p111
      %p113 = scmp.ne.s32.totalorder %s105, %s107
      %p114 = scmp.eq.s32.totalorder %s29, 1
      %p115 = por %p113, %p114
      %p116 = scmp.ne.s32.totalorder %s107, %s108
      %p117 = scmp.eq.s32.totalorder %s29, 0
      %p118 = por %p116, %p117
      %p119 = scmp.ne.s32.totalorder %s107, %s108
      %p120 = scmp.eq.s32.totalorder %s30, 1
      %p121 = por %p119, %p120
      %p123 = scmp.ne.s32.totalorder %s108, %s122
      %p124 = scmp.eq.s32.totalorder %s30, 0
      %p125 = por %p123, %p124
      %s126 = ssub.s32 %s24, %s31
      %p127 = scmp.eq.s32.totalorder %s126, 0
      %s129 = sadd.s32 %s128, 1
      %s130 = scalar_select %p127, %s128, %s129
      %p133 = pneg %p127
      %p134 = scmp.eq.s32.totalorder %s24, 1
      %p135 = por %p133, %p134
      %p136 = scmp.ne.s32.totalorder %s128, %s131
      %p137 = scmp.eq.s32.totalorder %s24, 0
      %p138 = por %p136, %p137
      %p139 = scmp.ne.s32.totalorder %s128, %s131
      %p140 = scmp.eq.s32.totalorder %s29, 1
      %p141 = por %p139, %p140
      %p142 = scmp.ne.s32.totalorder %s131, %s132
      %p143 = scmp.eq.s32.totalorder %s29, 0
      %p144 = por %p142, %p143
      %p145 = scmp.ne.s32.totalorder %s131, %s132
      %p146 = scmp.eq.s32.totalorder %s30, 1
      %p147 = por %p145, %p146
      %p149 = scmp.ne.s32.totalorder %s132, %s148
      %p150 = scmp.eq.s32.totalorder %s30, 0
      %p151 = por %p149, %p150
      %s152 = ssub.s32 %s24, %s31
      %p153 = scmp.eq.s32.totalorder %s152, 0
      %s155 = sadd.s32 %s154, 1
      %s156 = scalar_select %p153, %s154, %s155
      %p159 = pneg %p153
      %p160 = scmp.eq.s32.totalorder %s24, 1
      %p161 = por %p159, %p160
      %p162 = scmp.ne.s32.totalorder %s154, %s157
      %p163 = scmp.eq.s32.totalorder %s24, 0
      %p164 = por %p162, %p163
      %p165 = scmp.ne.s32.totalorder %s154, %s157
      %p166 = scmp.eq.s32.totalorder %s29, 1
      %p167 = por %p165, %p166
      %p168 = scmp.ne.s32.totalorder %s157, %s158
      %p169 = scmp.eq.s32.totalorder %s29, 0
      %p170 = por %p168, %p169
      %p171 = scmp.ne.s32.totalorder %s157, %s158
      %p172 = scmp.eq.s32.totalorder %s30, 1
      %p173 = por %p171, %p172
      %p175 = scmp.ne.s32.totalorder %s158, %s174
      %p176 = scmp.eq.s32.totalorder %s30, 0
      %p177 = por %p175, %p176
      %p178 = scmp.le.s32.totalorder 1, %s24
      %p179 = scmp.lt.s32.totalorder %s24, 3
      %p180 = pnand %p178, %p179
      %p181 = pneg %p180
      // Predicated region
      $region9: #{tpu_custom_call.1} parent=5 // pred_check
        _
      $region10: #{tpu_custom_call.1} parent=5 // pred_check_branch
        %183 = sbr.rel (%p180) target = $region12
      $region11: #{tpu_custom_call.1} parent=5 // pred_region
        %s184 = ssub.s32 %s24, 1
        // Predicated region
        $region13: #{tpu_custom_call.1} parent=11 // pred_check
          %p185 = pneg %p97
        $region14: #{tpu_custom_call.1} parent=11 // pred_check_branch
          %187 = sbr.rel (%p185) target = $region16
        $region15: #{tpu_custom_call.1} parent=11 // pred_region
          _
        $region16: #{tpu_custom_call.1} parent=11 // pred_fallthru
          _
        // Predicated region
        $region17: #{tpu_custom_call.1} parent=11 // pred_check
          %p188 = pneg %p118
        $region18: #{tpu_custom_call.1} parent=11 // pred_check_branch
          %190 = sbr.rel (%p188) target = $region20
        $region19: #{tpu_custom_call.1} parent=11 // pred_region
          _
        $region20: #{tpu_custom_call.1} parent=11 // pred_fallthru
          _
      $region12: #{tpu_custom_call.1} parent=5 // pred_fallthru
        _
      %p191 = scmp.lt.s32.totalorder %s24, 2
      // Predicated region
      $region21: #{tpu_custom_call.1} parent=5 // pred_check
        %p192 = pneg %p191
      $region22: #{tpu_custom_call.1} parent=5 // pred_check_branch
        %194 = sbr.rel (%p192) target = $region24
      $region23: #{tpu_custom_call.1} parent=5 // pred_region
        // Predicated region
        $region25: #{tpu_custom_call.1} parent=23 // pred_check
          %p195 = pneg %p44
        $region26: #{tpu_custom_call.1} parent=23 // pred_check_branch
          %197 = sbr.rel (%p195) target = $region28
        $region27: #{tpu_custom_call.1} parent=23 // pred_region
          %s198 = sand.u32 %s34, 1
          %s199 = scalar_lea.sflag [#allocation3], %s198
          %s200 = sand.u32 %s34, 1
          %s201 = smul.addr %s200, 8
          %s202 = scalar_lea.vmem [#allocation2], %s201
          %s204 = ssub.s32 128, 128
          %205 = vsyncadd %s199, %s204
          %s206 = smul.addr %s24, 128
          %s207 = scalar_lea.hbm %s0, %s206
          %s209 = sshll.u32 %s202, 4
          %s210 = int_to_ptr.vmem [resolvable:$true] %s209
          %212 = dma.hbm_to_vmem [thread:$0]  %s207, 128, %s210, %s199
        $region28: #{tpu_custom_call.1} parent=23 // pred_fallthru
          _
        // Predicated region
        $region29: #{tpu_custom_call.1} parent=23 // pred_check
          %p213 = pneg %p70
        $region30: #{tpu_custom_call.1} parent=23 // pred_check_branch
          %215 = sbr.rel (%p213) target = $region32
        $region31: #{tpu_custom_call.1} parent=23 // pred_region
          %s216 = sand.u32 %s60, 1
          %s217 = scalar_lea.sflag [#allocation6], %s216
          %s218 = sand.u32 %s60, 1
          %s219 = smul.addr %s218, 8
          %s220 = scalar_lea.vmem [#allocation5], %s219
          %s222 = ssub.s32 128, 128
          %223 = vsyncadd %s217, %s222
          %s224 = smul.addr %s24, 128
          %s225 = scalar_lea.hbm %s1, %s224
          %s227 = sshll.u32 %s220, 4
          %s228 = int_to_ptr.vmem [resolvable:$true] %s227
          %230 = dma.hbm_to_vmem [thread:$0]  %s225, 128, %s228, %s217
        $region32: #{tpu_custom_call.1} parent=23 // pred_fallthru
          _
      $region24: #{tpu_custom_call.1} parent=5 // pred_fallthru
        _
      %p231 = scmp.le.s32.totalorder 1, %s24
      %p232 = scmp.lt.s32.totalorder %s24, 3
      %p233 = pnand %p231, %p232
      %p234 = pneg %p233
      // Predicated region
      $region33: #{tpu_custom_call.1} parent=5 // pred_check
        _
      $region34: #{tpu_custom_call.1} parent=5 // pred_check_branch
        %236 = sbr.rel (%p233) target = $region36
      $region35: #{tpu_custom_call.1} parent=5 // pred_region
        %s237 = ssub.s32 %s24, 1
        %s238 = sand.u32 %s37, 1
        %s239 = scalar_lea.sflag [#allocation3], %s238
        %s240 = sand.u32 %s37, 1
        %s241 = smul.addr %s240, 8
        %s242 = scalar_lea.vmem [#allocation2], %s241
        // Predicated region
        $region37: #{tpu_custom_call.1} parent=35 // pred_check
          %p243 = pneg %p50
        $region38: #{tpu_custom_call.1} parent=35 // pred_check_branch
          %245 = sbr.rel (%p243) target = $region40
        $region39: #{tpu_custom_call.1} parent=35 // pred_region
          %246 = dma.done %s239, 128
        $region40: #{tpu_custom_call.1} parent=35 // pred_fallthru
          _
        %s247 = sand.u32 %s63, 1
        %s248 = scalar_lea.sflag [#allocation6], %s247
        %s249 = sand.u32 %s63, 1
        %s250 = smul.addr %s249, 8
        %s251 = scalar_lea.vmem [#allocation5], %s250
        // Predicated region
        $region41: #{tpu_custom_call.1} parent=35 // pred_check
          %p252 = pneg %p76
        $region42: #{tpu_custom_call.1} parent=35 // pred_check_branch
          %254 = sbr.rel (%p252) target = $region44
        $region43: #{tpu_custom_call.1} parent=35 // pred_region
          %255 = dma.done %s248, 128
        $region44: #{tpu_custom_call.1} parent=35 // pred_fallthru
          _
        %s256 = sand.u32 %s37, 1
        %s257 = scalar_lea.sflag [#allocation3], %s256
        %s258 = sand.u32 %s37, 1
        %s259 = smul.addr %s258, 8
        %s260 = scalar_lea.vmem [#allocation2], %s259
        %p261 = pneg %p50
        %p262 = pneg %p47
        %s263 = sand.u32 %s63, 1
        %s264 = scalar_lea.sflag [#allocation6], %s263
        %s265 = sand.u32 %s63, 1
        %s266 = smul.addr %s265, 8
        %s267 = scalar_lea.vmem [#allocation5], %s266
        %p268 = pneg %p76
        %p269 = pneg %p73
        %p270 = pneg %p97
        %p271 = pneg %p94
        %p272 = pneg %p118
        %p273 = pneg %p115
        %p274 = pneg %p144
        %p275 = pneg %p141
        %s276 = sand.u32 %s131, 1
        %s277 = scalar_lea.sflag [#allocation4], %s276
        %s278 = sand.u32 %s131, 1
        %s279 = smul.addr %s278, 32
        %s280 = scalar_lea.vmem [#allocation7], %s279
        %p281 = pneg %p170
        %p282 = pneg %p167
        %s283 = sand.u32 %s157, 1
        %s284 = scalar_lea.sflag [#allocation9], %s283
        %s285 = sand.u32 %s157, 1
        %s286 = smul.addr %s285, 32
        %s287 = scalar_lea.vmem [#allocation8], %s286
        %v288 = vld [vmem:[%s242] sm:$0xff]
        %v289 = vld [vmem:[%s251] sm:$0xff]
        %v290 = vld [vmem:[%s2] sm:$0x1]
        %v292 = vlaneseq
        %v293 = vshrl.u32 %v292, 7
        %v294 = vsub.s32 0, %v293
        %v295 = vrot.slane %v290, %v294
        %v297 = vadd.f32 %v288, %v295
        %298 = vst [vmem:[%s280] sm:$0xff] %v297
        %v299 = vld [vmem:[%s3] sm:$0x1]
        %v301 = vlaneseq
        %v302 = vshrl.u32 %v301, 7
        %v303 = vsub.s32 0, %v302
        %v304 = vrot.slane %v299, %v303
        %v306 = vadd.f32 %v289, %v304
        %307 = vst [vmem:[%s287] sm:$0xff] %v306
        %v308 = vld [vmem:[%s2 + $0x1] sm:$0x1]
        %v310 = vlaneseq
        %v311 = vshrl.u32 %v310, 7
        %v312 = vsub.s32 0, %v311
        %v313 = vrot.slane %v308, %v312
        %v315 = vadd.f32 %v288, %v313
        %316 = vst [vmem:[%s280 + $0x8] sm:$0xff] %v315
        %v317 = vld [vmem:[%s3 + $0x1] sm:$0x1]
        %v319 = vlaneseq
        %v320 = vshrl.u32 %v319, 7
        %v321 = vsub.s32 0, %v320
        %v322 = vrot.slane %v317, %v321
        %v324 = vadd.f32 %v289, %v322
        %325 = vst [vmem:[%s287 + $0x8] sm:$0xff] %v324
        %v326 = vld [vmem:[%s2 + $0x2] sm:$0x1]
        %v328 = vlaneseq
        %v329 = vshrl.u32 %v328, 7
        %v330 = vsub.s32 0, %v329
        %v331 = vrot.slane %v326, %v330
        %v333 = vadd.f32 %v288, %v331
        %334 = vst [vmem:[%s280 + $0x10] sm:$0xff] %v333
        %v335 = vld [vmem:[%s3 + $0x2] sm:$0x1]
        %v337 = vlaneseq
        %v338 = vshrl.u32 %v337, 7
        %v339 = vsub.s32 0, %v338
        %v340 = vrot.slane %v335, %v339
        %v342 = vadd.f32 %v289, %v340
        %343 = vst [vmem:[%s287 + $0x10] sm:$0xff] %v342
        %v344 = vld [vmem:[%s2 + $0x3] sm:$0x1]
        %v346 = vlaneseq
        %v347 = vshrl.u32 %v346, 7
        %v348 = vsub.s32 0, %v347
        %v349 = vrot.slane %v344, %v348
        %v351 = vadd.f32 %v288, %v349
        %352 = vst [vmem:[%s280 + $0x18] sm:$0xff] %v351
        %v353 = vld [vmem:[%s3 + $0x3] sm:$0x1]
        %v355 = vlaneseq
        %v356 = vshrl.u32 %v355, 7
        %v357 = vsub.s32 0, %v356
        %v358 = vrot.slane %v353, %v357
        %v360 = vadd.f32 %v289, %v358
        %361 = vst [vmem:[%s287 + $0x18] sm:$0xff] %v360
        %s362 = sand.u32 %s131, 1
        %s363 = scalar_lea.sflag [#allocation4], %s362
        %s364 = sand.u32 %s131, 1
        %s365 = smul.addr %s364, 32
        %s366 = scalar_lea.vmem [#allocation7], %s365
        %s367 = sand.u32 %s157, 1
        %s368 = scalar_lea.sflag [#allocation9], %s367
        %s369 = sand.u32 %s157, 1
        %s370 = smul.addr %s369, 32
        %s371 = scalar_lea.vmem [#allocation8], %s370
        // Predicated region
        $region45: #{tpu_custom_call.1} parent=35 // pred_check
          %p372 = pneg %p141
        $region46: #{tpu_custom_call.1} parent=35 // pred_check_branch
          %374 = sbr.rel (%p372) target = $region48
        $region47: #{tpu_custom_call.1} parent=35 // pred_region
          %s376 = ssub.s32 512, 512
          %377 = vsyncadd %s363, %s376
          %s378 = smul.addr %s29, 4
          %s379 = smul.addr %s378, 128
          %s380 = scalar_lea.hbm %s4, %s379
          %s382 = sshll.u32 %s366, 4
          %s383 = int_to_ptr.vmem [resolvable:$true] %s382
          %385 = dma.vmem_to_hbm [thread:$0]  %s383, 512, %s380, %s363
        $region48: #{tpu_custom_call.1} parent=35 // pred_fallthru
          _
        // Predicated region
        $region49: #{tpu_custom_call.1} parent=35 // pred_check
          %p386 = pneg %p167
        $region50: #{tpu_custom_call.1} parent=35 // pred_check_branch
          %388 = sbr.rel (%p386) target = $region52
        $region51: #{tpu_custom_call.1} parent=35 // pred_region
          %s390 = ssub.s32 512, 512
          %391 = vsyncadd %s368, %s390
          %s392 = smul.addr %s29, 4
          %s393 = smul.addr %s392, 128
          %s394 = scalar_lea.hbm %s5, %s393
          %s396 = sshll.u32 %s371, 4
          %s397 = int_to_ptr.vmem [resolvable:$true] %s396
          %399 = dma.vmem_to_hbm [thread:$0]  %s397, 512, %s394, %s368
        $region52: #{tpu_custom_call.1} parent=35 // pred_fallthru
          _
      $region36: #{tpu_custom_call.1} parent=5 // pred_fallthru
        _
      %p400 = scmp.le.s32.totalorder 2, %s24
      // Predicated region
      $region53: #{tpu_custom_call.1} parent=5 // pred_check
        %p401 = pneg %p400
      $region54: #{tpu_custom_call.1} parent=5 // pred_check_branch
        %403 = sbr.rel (%p401) target = $region56
      $region55: #{tpu_custom_call.1} parent=5 // pred_region
        %s404 = ssub.s32 %s24, 2
        // Predicated region
        $region57: #{tpu_custom_call.1} parent=55 // pred_check
          %p405 = pneg %p147
        $region58: #{tpu_custom_call.1} parent=55 // pred_check_branch
          %407 = sbr.rel (%p405) target = $region60
        $region59: #{tpu_custom_call.1} parent=55 // pred_region
          %s408 = sand.u32 %s132, 1
          %s409 = scalar_lea.sflag [#allocation4], %s408
          %s410 = sand.u32 %s132, 1
          %s411 = smul.addr %s410, 32
          %s412 = scalar_lea.vmem [#allocation7], %s411
          %413 = dma.done %s409, 512
        $region60: #{tpu_custom_call.1} parent=55 // pred_fallthru
          _
        // Predicated region
        $region61: #{tpu_custom_call.1} parent=55 // pred_check
          %p414 = pneg %p173
        $region62: #{tpu_custom_call.1} parent=55 // pred_check_branch
          %416 = sbr.rel (%p414) target = $region64
        $region63: #{tpu_custom_call.1} parent=55 // pred_region
          %s417 = sand.u32 %s158, 1
          %s418 = scalar_lea.sflag [#allocation9], %s417
          %s419 = sand.u32 %s158, 1
          %s420 = smul.addr %s419, 32
          %s421 = scalar_lea.vmem [#allocation8], %s420
          %422 = dma.done %s418, 512
        $region64: #{tpu_custom_call.1} parent=55 // pred_fallthru
          _
      $region56: #{tpu_custom_call.1} parent=5 // pred_fallthru
        _
    $region6: #{tpu_custom_call.1} parent=1 // loop_footer
      %s28 = sadd.s32 1, %s24
    $region7: #{tpu_custom_call.1} parent=1 // loop_footer_branch
      %23 = sbr.rel target = $region3
    $region8: #{tpu_custom_call.1} parent=1 // loop_exit
      _
    %423 = vsyncpa [#allocation3], 1
    %s424 = scalar_lea.sflag [#allocation3], 1
    %425 = vsyncpa %s424, 1
    %426 = vsyncpa [#allocation6], 1
    %s427 = scalar_lea.sflag [#allocation6], 1
    %428 = vsyncpa %s427, 1
    %429 = vsyncpa [#allocation4], 1
    %s430 = scalar_lea.sflag [#allocation4], 1
    %431 = vsyncpa %s430, 1
    %432 = vsyncpa [#allocation9], 1
    %s433 = scalar_lea.sflag [#allocation9], 1
    %434 = vsyncpa %s433, 1

</llo_original>
